<compile_context>
chip_gen: v7x
topology: tpu7x:2x2x1
jax: 0.10.0
libtpu: 0.0.40
codegen_flags: <defaults>
</compile_context>

<pallas_src>
import math

import jax
import jax.numpy as jnp
from jax.experimental import pallas as pl
from jax.experimental.pallas import tpu as pltpu


_LANE = 128
_SUBLANE = {4: 8, 2: 16, 1: 32}                  # native sublane tile by itemsize


# ---------------- kernels ----------------

def _sigmoid_f32(z, out_dtype):
    """sigmoid(z) with z in f32.  For sub-32-bit outputs use the EUP approx
    reciprocal (error well below bf16/f16 precision); exact sigmoid for f32."""
    if jnp.dtype(out_dtype).itemsize < 4:
        return pl.reciprocal(1.0 + jnp.exp(-z), approx=True)
    return jax.nn.sigmoid(z)


def _swish_kernel(x_ref, o_ref):
    # frozen beta == 1.0:  y = x * sigmoid(x)
    x = x_ref[...].astype(jnp.float32)
    o_ref[...] = (x * _sigmoid_f32(x, o_ref.dtype)).astype(o_ref.dtype)


def _swish_scalar_beta_kernel(beta_ref, x_ref, o_ref):
    # learnable scalar beta (isize=None):  y = x * sigmoid(beta * x)
    x = x_ref[...].astype(jnp.float32)
    b = beta_ref[0].astype(jnp.float32)          # scalar from SMEM
    o_ref[...] = (x * _sigmoid_f32(b * x, o_ref.dtype)).astype(o_ref.dtype)


def _swish_beta_kernel(x_ref, beta_ref, o_ref):
    # learnable per-feature beta:  y = x * sigmoid(beta * x)
    x = x_ref[...].astype(jnp.float32)
    b = beta_ref[...].astype(jnp.float32)        # (1, bn) broadcasts over rows
    o_ref[...] = (x * _sigmoid_f32(b * x, o_ref.dtype)).astype(o_ref.dtype)


# ---------------- tiling helpers ----------------

def _round_up(a, b):
    return ((a + b - 1) // b) * b


_TPU_CAPS_CACHE = None


def _tpu_caps():
    """(vmem_capacity_bytes, is_v7x_like).  v7x has 64 MiB VMEM per TC while
    v5e/v6e have 128 MiB, so capacity doubles as a generation heuristic."""
    global _TPU_CAPS_CACHE
    if _TPU_CAPS_CACHE is None:
        cap = 0
        try:
            cap = int(pltpu.get_tpu_info().vmem_capacity_bytes)
        except Exception:
            cap = 0
        if cap <= 0:
            cap = 64 * 1024 * 1024               # conservative default
        _TPU_CAPS_CACHE = (cap, cap <= 64 * 1024 * 1024)
    return _TPU_CAPS_CACHE


def _compiler_params(n_grid_dims):
    cap, is_v7x = _tpu_caps()
    limit = (48 << 20) if is_v7x else (32 << 20)
    limit = min(limit, cap * 3 // 4)
    return pltpu.CompilerParams(
        dimension_semantics=("parallel",) * n_grid_dims,
        vmem_limit_bytes=int(limit),
    )


def _block_rows(n_rows, width, itemsize):
    """Row tile sized from a per-generation VMEM budget (in+out double-buffered
    stays well inside the vmem limit); multiple of the sublane tile; the
    small-tensor fallback keeps >=2 grid steps (>=4 on v7x: 2 TensorCores)."""
    sub = _SUBLANE.get(itemsize, 8)
    if n_rows <= sub:
        return n_rows                            # single full-extent block (legal)
    _, is_v7x = _tpu_caps()
    budget = (8 << 20) if is_v7x else (4 << 20)  # bytes per block
    bm = max(sub, (budget // max(1, width * itemsize)) // sub * sub)
    if bm >= n_rows:
        target_steps = 4 if is_v7x else 2
        bm = max(sub, _round_up(pl.cdiv(n_rows, target_steps), sub))
    return bm


def _choose_slab(total, itemsize):
    """(rows, width, pad): width is a multiple of 128.  Prefer a width that
    divides `total` exactly -> no pad/concat/slice HBM passes.  Only pads when
    total % 128 != 0 (swish(0) == 0, so the padded tail is benign)."""
    for w in (4096, 2048, 1024, 512, 256, 128):
        if total % w == 0:
            return total // w, w, 0
    w = _LANE
    for cand in (4096, 2048, 1024, 512, 256):
        if total >= cand * 16:
            w = cand
            break
    rows = pl.cdiv(total, w)
    return rows, w, rows * w - total


# ---------------- wrappers ----------------

def swish(x):
    """Swish with frozen beta = 1.0 (the module's default ctor)."""
    if x.size == 0:
        return x
    orig_shape = x.shape
    total = x.size
    itemsize = jnp.dtype(x.dtype).itemsize

    rows, width, pad = _choose_slab(total, itemsize)
    flat = x.reshape(-1)
    if pad:
        # Rare path (total % 128 != 0): swish(0) == 0, pad sliced off below.
        flat = jnp.concatenate([flat, jnp.zeros((pad,), dtype=x.dtype)])
    x2 = flat.reshape(rows, width)

    bm = _block_rows(rows, width, itemsize)
    grid = (pl.cdiv(rows, bm),)

    out = pl.pallas_call(
        _swish_kernel,
        out_shape=jax.ShapeDtypeStruct((rows, width), x.dtype),
        grid_spec=pltpu.PrefetchScalarGridSpec(
            num_scalar_prefetch=0,
            grid=grid,
            in_specs=[pl.BlockSpec((bm, width), lambda i: (i, 0))],
            out_specs=pl.BlockSpec((bm, width), lambda i: (i, 0)),
        ),
        compiler_params=_compiler_params(1),
    )(x2)

    out = out.reshape(-1)
    if pad:
        out = out[:total]
    return out.reshape(orig_shape)


def _swish_scalar_beta(x, beta):
    """Learnable scalar beta through the wide-slab path; beta lives in SMEM."""
    if x.size == 0:
        return x
    orig_shape = x.shape
    total = x.size
    itemsize = jnp.dtype(x.dtype).itemsize

    rows, width, pad = _choose_slab(total, itemsize)
    flat = x.reshape(-1)
    if pad:
        flat = jnp.concatenate([flat, jnp.zeros((pad,), dtype=x.dtype)])
    x2 = flat.reshape(rows, width)

    bm = _block_rows(rows, width, itemsize)
    grid = (pl.cdiv(rows, bm),)
    beta_s = jnp.asarray(beta, dtype=jnp.float32).reshape(1)

    out = pl.pallas_call(
        _swish_scalar_beta_kernel,
        out_shape=jax.ShapeDtypeStruct((rows, width), x.dtype),
        grid_spec=pltpu.PrefetchScalarGridSpec(
            num_scalar_prefetch=0,
            grid=grid,
            in_specs=[
                pl.BlockSpec(memory_space=pltpu.MemorySpace.SMEM),   # beta (1,)
                pl.BlockSpec((bm, width), lambda i: (i, 0)),
            ],
            out_specs=pl.BlockSpec((bm, width), lambda i: (i, 0)),
        ),
        compiler_params=_compiler_params(1),
    )(beta_s, x2)

    out = out.reshape(-1)
    if pad:
        out = out[:total]
    return out.reshape(orig_shape)


def swish_learnable(x, beta):
    """Swish with learnable beta: per-feature (shape [isize]) or scalar."""
    if x.size == 0:
        return x
    orig_shape = x.shape
    n = orig_shape[-1]
    beta = jnp.asarray(beta)

    if beta.size == 1:                           # isize=None case in the module
        try:
            return _swish_scalar_beta(x, beta)
        except Exception:
            # Safety net only: broadcast and use the per-feature path.
            beta = jnp.full((n,), beta.reshape(()), dtype=beta.dtype)

    assert beta.shape == (n,), "beta must broadcast over the last dim (isize)"
    itemsize = jnp.dtype(x.dtype).itemsize

    x2 = x.reshape(-1, n)
    m = x2.shape[0]

    # Choose a fold factor k (k rows folded into the feature axis) so blocks
    # are lane-dense; never pad unless unavoidable:
    #   1) n % 128 == 0                       -> no fold needed.
    #   2) largest k in {k_min * 2^j} (grown toward width >= 512) dividing m.
    #   3) wide-feature fallback              -> unfolded, ragged 128-mult tiles.
    #   4) last resort                        -> pad rows (swish(0) == 0).
    pad_rows = 0
    if n % _LANE == 0:
        k = 1
    else:
        k_min = _LANE // math.gcd(n, _LANE)
        cand = k_min
        while cand * n < 512 and cand < 64:
            cand *= 2
        k = 0
        while cand >= k_min:
            if m % cand == 0:
                k = cand
                break
            cand //= 2
        if k == 0:
            if n >= _LANE:
                k = 1                            # ragged lane tiling, no pad
            else:
                k = k_min                        # last resort: pad rows
                pad_rows = _round_up(m, k) - m
                x2 = jnp.concatenate(
                    [x2, jnp.zeros((pad_rows, n), dtype=x.dtype)], axis=0)

    rows = (m + pad_rows) // k
    width = k * n
    x2 = x2.reshape(rows, width)
    beta2 = (jnp.tile(beta, k) if k > 1 else beta).reshape(1, width)

    # Feature tile: multiple of 128 (ragged last block is fine) or full width;
    # row tile from the per-generation VMEM budget.
    bn = width if width <= 4096 else 4096
    bm = _block_rows(rows, bn, itemsize)
    grid = (pl.cdiv(rows, bm), pl.cdiv(width, bn))

    out = pl.pallas_call(
        _swish_beta_kernel,
        out_shape=jax.ShapeDtypeStruct((rows, width), x.dtype),
        grid_spec=pltpu.PrefetchScalarGridSpec(
            num_scalar_prefetch=0,
            grid=grid,
            in_specs=[
                pl.BlockSpec((bm, bn), lambda i, j: (i, j)),
                pl.BlockSpec((1, bn), lambda i, j: (0, j)),
            ],
            out_specs=pl.BlockSpec((bm, bn), lambda i, j: (i, j)),
        ),
        compiler_params=_compiler_params(2),
    )(x2, beta2)

    out = out.reshape(m + pad_rows, n)
    if pad_rows:
        out = out[:m]
    return out.reshape(orig_shape)


# ---------------- main ----------------

if __name__ == "__main__":
    key = jax.random.PRNGKey(0)
    k1, k2 = jax.random.split(key)

    # Case 1: default Swish (beta frozen at 1.0) on an NCHW-like tensor.
    x_img = jax.random.normal(k1, (2, 4, 16, 16), dtype=jnp.float32)
    y1 = jax.block_until_ready(swish(x_img))
    ref1 = x_img * jax.nn.sigmoid(x_img)
    assert jnp.allclose(y1, ref1, atol=1e-6, rtol=1e-6)

    # Case 1b: bf16 input exercises the EUP approx-reciprocal sigmoid path.
    x_bf = x_img.astype(jnp.bfloat16)
    y1b = jax.block_until_ready(swish(x_bf))
    xf = x_bf.astype(jnp.float32)
    ref1b = xf * jax.nn.sigmoid(xf)
    assert jnp.allclose(y1b.astype(jnp.float32), ref1b, atol=3e-2, rtol=3e-2)

    # Case 2: learnable beta with isize = hidden dim (mirrors
    # torch.tensor([beta]).repeat(isize) with beta = 1.5).
    hidden = 32
    x_seq = jax.random.normal(k2, (2, 8, hidden), dtype=jnp.float32)
    beta = jnp.full((hidden,), 1.5, dtype=jnp.float32)
    y2 = jax.block_until_ready(swish_learnable(x_seq, beta))
    ref2 = x_seq * jax.nn.sigmoid(beta * x_seq)
    assert jnp.allclose(y2, ref2, atol=1e-6, rtol=1e-6)

    # Case 3: learnable scalar beta (isize=None in the module).
    y3 = jax.block_until_ready(swish_learnable(x_seq, jnp.array([0.75], jnp.float32)))
    ref3 = x_seq * jax.nn.sigmoid(0.75 * x_seq)
    assert jnp.allclose(y3, ref3, atol=1e-6, rtol=1e-6)

    print("KERNEL_OK")
</pallas_src>

<mosaic_0001>
module attributes {stable_mosaic.version = 11 : i64} {
  func.func @_swish_kernel(%arg0: i32, %arg1: memref<1x2048xf32, #tpu.memory_space<vmem>>, %arg2: memref<1x2048xf32, #tpu.memory_space<vmem>>) attributes {dimension_semantics = [#tpu.dimension_semantics<parallel>], iteration_bounds = array<i64: 1>, scalar_prefetch = 0 : i64, scratch_operands = 0 : i64, tpu.core_type = #tpu.core_type<tc>, window_params = [{transform_indices = @transform_0, window_bounds = array<i64: 1, 2048>}, {transform_indices = @transform_1, window_bounds = array<i64: 1, 2048>}]} {
    %c0 = arith.constant 0 : index
    %c0_0 = arith.constant 0 : index
    %0 = vector.load %arg1[%c0, %c0_0] : memref<1x2048xf32, #tpu.memory_space<vmem>>, vector<1x2048xf32>
    %1 = arith.negf %0 : vector<1x2048xf32>
    %2 = math.exp %1 : vector<1x2048xf32>
    %cst = arith.constant 1.000000e+00 : f32
    %3 = vector.broadcast %cst : f32 to vector<1x2048xf32>
    %4 = arith.addf %3, %2 : vector<1x2048xf32>
    %5 = arith.divf %3, %4 : vector<1x2048xf32>
    %6 = arith.mulf %0, %5 : vector<1x2048xf32>
    %c0_1 = arith.constant 0 : index
    %c0_2 = arith.constant 0 : index
    %7 = vector.load %arg2[%c0_1, %c0_2] : memref<1x2048xf32, #tpu.memory_space<vmem>>, vector<1x2048xf32>
    tpu.vector_store %arg2[%c0_1, %c0_2], %6 {strides = array<i32>} : memref<1x2048xf32, #tpu.memory_space<vmem>>, vector<1x2048xf32>,
    return
  }
  func.func @transform_0(%arg0: i32) -> (i32, i32) {
    %c0_i32 = arith.constant 0 : i32
    %c0_i32_0 = arith.constant 0 : i32
    return %arg0, %c0_i32 : i32, i32
  }
  func.func @transform_1(%arg0: i32) -> (i32, i32) {
    %c0_i32 = arith.constant 0 : i32
    %c0_i32_0 = arith.constant 0 : i32
    return %arg0, %c0_i32 : i32, i32
  }
}

</mosaic_0001>

<llo_original>
// kernel: tpu_custom_call.1
$region0: #{tpu_custom_call.1}
  #allocation0 [shape = 'u32[]', space=smem, size = 0x4, offset = 0x4, fixed_abs, tag = 'smem constant byte address 0x4 - core index']
  #allocation1 [shape = 'u32[144,128]{1,0:T(1,128)}', space=vmem, size = 0x12000, scoped, tag = 'internal scratch']
  %s0 = inlined_call_operand.hbm [shape: f32[1,2048], index: 0, kind: input, shape index: {}]
  %s1 = inlined_call_operand.hbm [shape: f32[1,2048], index: 1, kind: output, shape index: {}]
  %s2 = sld [smem:[#allocation0]]
  $region18: #{tpu_custom_call.1} parent=0
    _
  %s4 = ssub.s32 1, %s2
  %s5 = scalar_select 0, %s4, %s2
  $region1: #{tpu_custom_call.1} parent=0
    #allocation2 [shape = 'u8[8192]{0}', space=vmem, size = 0x2000, scoped, tag = 'input window, operand 0, single buffered']
    #allocation3 [shape = 's32[1]{0}', space=sflag, size = 0x4, scoped, tag = 'scoped memory for tpu_custom_call.1']
    #allocation4 [shape = 's32[1]{0}', space=sflag, size = 0x4, scoped, tag = 'scoped memory for tpu_custom_call.1']
    #allocation5 [shape = 'u8[8192]{0}', space=vmem, size = 0x2000, scoped, tag = 'output window, operand 0, single buffered']
    %6 = vsyncpa [#allocation3], 0
    %7 = vsyncpa [#allocation4], 0
    // Predicated region
    $region2: #{tpu_custom_call.1} parent=1 // pred_check
      _
    $region3: #{tpu_custom_call.1} parent=1 // pred_check_branch
      %9 = sbr.rel (0) target = $region5
    $region4: #{tpu_custom_call.1} parent=1 // pred_region
      %s11 = ssub.s32 256, 256
      %12 = vsyncadd [#allocation3], %s11
      %s14 = sshll.u32 [#allocation2], 4
      %s15 = int_to_ptr.vmem [resolvable:$true] %s14
      %17 = dma.hbm_to_vmem [thread:$0]  %s0, 256, %s15, [#allocation3]
    $region5: #{tpu_custom_call.1} parent=1 // pred_fallthru
      _
    // Predicated region
    $region6: #{tpu_custom_call.1} parent=1 // pred_check
      _
    $region7: #{tpu_custom_call.1} parent=1 // pred_check_branch
      %19 = sbr.rel (0) target = $region9
    $region8: #{tpu_custom_call.1} parent=1 // pred_region
      %20 = dma.done [#allocation3], 256
    $region9: #{tpu_custom_call.1} parent=1 // pred_fallthru
      _
    %v21 = vld [vmem:[#allocation2] sm:$0xff]
    %v22 = vld [vmem:[#allocation2 + $0x8] sm:$0xff]
    %v23 = vxor.u32 %v21, 2147483648
    %v24 = vxor.u32 %v22, 2147483648
    %v25 = vmul.f32 %v23, 1.442695
    %v26 = vpow.pop %v25
    %v27 = vmul.f32 %v24, 1.442695
    %v28 = vpow.pop %v27
    %v29 = vadd.f32 %v26, 1.0
    %v30 = vadd.f32 %v28, 1.0
    %v31 = vrcp.pop %v29
    %v32 = vmul.f32 1.0, %v31
    %v33 = vrcp.pop %v30
    %v34 = vmul.f32 1.0, %v33
    %v35 = vmul.f32 %v21, %v32
    %v36 = vmul.f32 %v22, %v34
    %37 = vst [vmem:[#allocation5] sm:$0xff] %v35
    %38 = vst [vmem:[#allocation5 + $0x8] sm:$0xff] %v36
    // Predicated region
    $region10: #{tpu_custom_call.1} parent=1 // pred_check
      _
    $region11: #{tpu_custom_call.1} parent=1 // pred_check_branch
      %40 = sbr.rel (0) target = $region13
    $region12: #{tpu_custom_call.1} parent=1 // pred_region
      %s42 = ssub.s32 256, 256
      %43 = vsyncadd [#allocation4], %s42
      %s45 = sshll.u32 [#allocation5], 4
      %s46 = int_to_ptr.vmem [resolvable:$true] %s45
      %48 = dma.vmem_to_hbm [thread:$0]  %s46, 256, %s1, [#allocation4]
    $region13: #{tpu_custom_call.1} parent=1 // pred_fallthru
      _
    // Predicated region
    $region14: #{tpu_custom_call.1} parent=1 // pred_check
      _
    $region15: #{tpu_custom_call.1} parent=1 // pred_check_branch
      %50 = sbr.rel (0) target = $region17
    $region16: #{tpu_custom_call.1} parent=1 // pred_region
      %51 = dma.done [#allocation4], 256
    $region17: #{tpu_custom_call.1} parent=1 // pred_fallthru
      _
    %52 = vsyncpa [#allocation3], 1
    %53 = vsyncpa [#allocation4], 1

</llo_original>
